<compile_context>
chip_gen: v5e
topology: v5e:2x2
jax: 0.10.0
libtpu: 0.0.40
codegen_flags: <defaults>
</compile_context>

<pallas_src>
import numpy as np
import jax
import jax.numpy as jnp
from jax.experimental import pallas as pl
from jax.experimental.pallas import tpu as pltpu

LANE = 128                       # TPU lane width (last dim)
BLOCK_BYTES = 4 * 1024 * 1024    # ~4 MiB per block: amortizes ~0.35us/step overhead,
                                 # 4 double-buffers fit in a 32 MiB scoped-VMEM budget.


def _round_up(a, b):
    return ((a + b - 1) // b) * b


# ----------------------------------------------------------------------------- kernel
def scale_kernel(scale_ref, x_ref, o_ref):
    # scale_ref: (1,) float32 in SMEM (the learned scalar parameter)
    # x_ref / o_ref: (block_rows, 128) tiles in VMEM
    # Multiply in f32 (x promotes against the f32 scalar); cast back on the store.
    o_ref[...] = (x_ref[...] * scale_ref[0]).astype(o_ref.dtype)


# ----------------------------------------------------------------------------- wrapper
def scale_forward(x, scale):
    """Pallas TPU implementation of ScaleLayer.forward: x * scale."""
    orig_shape = x.shape
    orig_dtype = x.dtype
    n = x.size
    itemsize = jnp.dtype(orig_dtype).itemsize
    sublane = max(8, 32 // itemsize)        # 8 for f32, 16 for bf16, 32 for int8/fp8

    # Lane-dense (rows, 128) layout via a *contiguous* reshape (no HBM pass).
    flat = x.reshape(-1)
    ragged = (n % LANE) != 0
    rows = -(-n // LANE)
    if ragged:
        # Rare path: pad the tail row to a full 128 lanes (one extra HBM pass; the
        # common n % 128 == 0 case pays nothing).
        flat = jnp.pad(flat, (0, rows * LANE - n))
    x2d = flat.reshape(rows, LANE)

    # Block size: byte budget, dtype-aware sublane rounding, and a cap so the grid has
    # >= 2 steps whenever possible (megacore sharding on v7x needs >1 grid step).
    budget_rows = BLOCK_BYTES // (LANE * itemsize)          # multiple of sublane
    half_rows = _round_up(-(-rows // 2), sublane)           # aim for >= 2 grid steps
    block_rows = max(sublane, min(budget_rows, half_rows))
    if block_rows >= rows:
        block_rows = rows   # single full-extent block (always a legal block shape)
    grid = (pl.cdiv(rows, block_rows),)     # ragged last block is masked by Pallas

    out2d = pl.pallas_call(
        scale_kernel,
        out_shape=jax.ShapeDtypeStruct((rows, LANE), orig_dtype),
        grid=grid,
        in_specs=[
            # learned scalar parameter -> SMEM (whole array, untiled, kept f32)
            pl.BlockSpec(memory_space=pltpu.MemorySpace.SMEM),
            # activations -> VMEM row-tiles, auto double-buffered by BlockSpec
            pl.BlockSpec((block_rows, LANE), lambda i: (i, 0)),
        ],
        out_specs=pl.BlockSpec((block_rows, LANE), lambda i: (i, 0)),
        compiler_params=pltpu.CompilerParams(
            dimension_semantics=("parallel",),     # megacore sharding on v7x
            vmem_limit_bytes=32 * 1024 * 1024,     # 4 x 4 MiB buffers fit on v5e too
        ),
        cost_estimate=pl.CostEstimate(
            flops=rows * LANE,
            transcendentals=0,
            bytes_accessed=2 * rows * LANE * itemsize,
        ),
    )(scale.reshape(1).astype(jnp.float32), x2d)

    out = out2d.reshape(-1)
    if ragged:
        out = out[:n]
    return out.reshape(orig_shape)


# ----------------------------------------------------------------------------- main
if __name__ == "__main__":
    key = jax.random.PRNGKey(0)
    k_x, k_s = jax.random.split(key)

    # Small shapes consistent with the module: batch=2, channels=4, spatial=16.
    x = jax.random.normal(k_x, (2, 4, 16, 16), jnp.float32)
    # Learned scalar parameter (init_value=1.0 perturbed so the test is non-trivial).
    scale = jnp.float32(1.0) + 0.5 * jax.random.normal(k_s, (1,), jnp.float32)

    out = scale_forward(x, scale)
    out = jax.block_until_ready(out)

    ref = x * scale[0]
    np.testing.assert_allclose(np.asarray(out), np.asarray(ref), rtol=1e-6, atol=1e-6)

    print("KERNEL_OK")
</pallas_src>

<mosaic_0001>
module attributes {stable_mosaic.version = 11 : i64} {
  func.func @scale_kernel(%arg0: i32, %arg1: memref<1xf32, #tpu.memory_space<smem>>, %arg2: memref<8x128xf32, #tpu.memory_space<vmem>>, %arg3: memref<8x128xf32, #tpu.memory_space<vmem>>) attributes {dimension_semantics = [#tpu.dimension_semantics<parallel>], iteration_bounds = array<i64: 2>, scalar_prefetch = 0 : i64, scratch_operands = 0 : i64, tpu.core_type = #tpu.core_type<tc>, window_params = [{transform_indices = @transform_0, window_bounds = array<i64: 1>}, {transform_indices = @transform_1, window_bounds = array<i64: 8, 128>}, {transform_indices = @transform_2, window_bounds = array<i64: 8, 128>}]} {
    %c0 = arith.constant 0 : index
    %c0_0 = arith.constant 0 : index
    %0 = vector.load %arg2[%c0, %c0_0] : memref<8x128xf32, #tpu.memory_space<vmem>>, vector<8x128xf32>
    %c0_1 = arith.constant 0 : index
    %1 = memref.load %arg1[%c0_1] : memref<1xf32, #tpu.memory_space<smem>>
    %2 = vector.broadcast %1 : f32 to vector<8x128xf32>
    %3 = arith.mulf %0, %2 : vector<8x128xf32>
    %c0_2 = arith.constant 0 : index
    %c0_3 = arith.constant 0 : index
    %4 = vector.load %arg3[%c0_2, %c0_3] : memref<8x128xf32, #tpu.memory_space<vmem>>, vector<8x128xf32>
    tpu.vector_store %arg3[%c0_2, %c0_3], %3 {strides = array<i32>} : memref<8x128xf32, #tpu.memory_space<vmem>>, vector<8x128xf32>,
    return
  }
  func.func @transform_0(%arg0: i32) -> i32 {
    %c0_i32 = arith.constant 0 : i32
    %c0_i32_0 = arith.constant 0 : i32
    return %c0_i32 : i32
  }
  func.func @transform_1(%arg0: i32) -> (i32, i32) {
    %c0_i32 = arith.constant 0 : i32
    %c0_i32_0 = arith.constant 0 : i32
    return %arg0, %c0_i32 : i32, i32
  }
  func.func @transform_2(%arg0: i32) -> (i32, i32) {
    %c0_i32 = arith.constant 0 : i32
    %c0_i32_0 = arith.constant 0 : i32
    return %arg0, %c0_i32 : i32, i32
  }
}

</mosaic_0001>

<llo_original>
// kernel: tpu_custom_call.1
$region0: #{tpu_custom_call.1}
  #allocation0 [shape = 'u32[]', space=smem, size = 0x4, offset = 0x4, fixed_abs, tag = 'smem constant byte address 0x4 - core index']
  #allocation1 [shape = 'u32[72,128]{1,0:T(1,128)}', space=vmem, size = 0x9000, scoped, tag = 'internal scratch']
  #allocation2 [shape = 'f32[1]{0:T(128)S(6)}', space=smem, size = 0x200, scoped, tag = 'scoped memory for tpu_custom_call.1']
  %s0 = inlined_call_operand.<no memory space> [shape: f32[1], index: 0, kind: input, shape index: {}]
  %s1 = inlined_call_operand.hbm [shape: f32[16,128], index: 1, kind: input, shape index: {}]
  %s2 = inlined_call_operand.hbm [shape: f32[16,128], index: 2, kind: output, shape index: {}]
  %s3 = sld [smem:[#allocation0]]
  $region45: #{tpu_custom_call.1} parent=0
    _
  %s5 = ssub.s32 1, %s3
  %s6 = scalar_select 0, %s5, %s3
  %7 = sst [smem:[#allocation2]] %s0
  $region1: #{tpu_custom_call.1} parent=0
    #allocation3 [shape = 'u8[8192]{0}', space=vmem, size = 0x2000, scoped, tag = 'input window, operand 1']
    #allocation4 [shape = 's32[2]{0}', space=sflag, size = 0x8, scoped, tag = 'scoped memory for tpu_custom_call.1']
    #allocation5 [shape = 's32[2]{0}', space=sflag, size = 0x8, scoped, tag = 'scoped memory for tpu_custom_call.1']
    #allocation6 [shape = 'u8[8192]{0}', space=vmem, size = 0x2000, scoped, tag = 'output window, operand 0']
    %8 = vsyncpa [#allocation4], 0
    %s9 = scalar_lea.sflag [#allocation4], 1
    %10 = vsyncpa %s9, 0
    %11 = vsyncpa [#allocation5], 0
    %s12 = scalar_lea.sflag [#allocation5], 1
    %13 = vsyncpa %s12, 0
    loop: start=0, step=1, limit=4
    $region2: #{tpu_custom_call.1} parent=1 // loop_pre_header
      _
    $region3: #{tpu_custom_call.1} parent=1 // loop_header
      %s15 = sphi 0, %s19
      %p16 = scmp.ge.s32.totalorder %s15, 4
      %s23 = sphi 0, %s23
      %s25 = sphi 0, %s23
      %s26 = sphi 0, %s25
      %s40 = sphi 0, %s26
      %s46 = sphi 0, %s48
      %s49 = sphi 0, %s46
      %s50 = sphi 0, %s49
      %s66 = sphi 0, %s50
      %s72 = sphi 0, %s74
      %s75 = sphi 0, %s72
      %s76 = sphi 0, %s75
      %s92 = sphi 0, %s76
    $region4: #{tpu_custom_call.1} parent=1 // loop_header_branch
      %18 = sbr.rel (%p16) target = $region8
    $region5: #{tpu_custom_call.1} parent=1 // loop_body
      %s20 = ssub.s32 %s15, 1
      %s21 = ssub.s32 %s15, 2
      %s22 = sadd.s32 %s15, 1
      %s24 = sadd.s32 %s23, 1
      %p27 = scmp.eq.s32.totalorder %s15, 1
      %p28 = scmp.ne.s32.totalorder %s23, %s25
      %p29 = scmp.eq.s32.totalorder %s15, 0
      %p30 = por %p28, %p29
      %p31 = scmp.ne.s32.totalorder %s23, %s25
      %p32 = scmp.eq.s32.totalorder %s20, 1
      %p33 = por %p31, %p32
      %p34 = scmp.ne.s32.totalorder %s25, %s26
      %p35 = scmp.eq.s32.totalorder %s20, 0
      %p36 = por %p34, %p35
      %p37 = scmp.ne.s32.totalorder %s25, %s26
      %p38 = scmp.eq.s32.totalorder %s21, 1
      %p39 = por %p37, %p38
      %p41 = scmp.ne.s32.totalorder %s26, %s40
      %p42 = scmp.eq.s32.totalorder %s21, 0
      %p43 = por %p41, %p42
      %s44 = ssub.s32 %s15, %s22
      %p45 = scmp.eq.s32.totalorder %s44, 0
      %s47 = sadd.s32 %s46, 1
      %s48 = scalar_select %p45, %s46, %s47
      %p51 = pneg %p45
      %p52 = scmp.eq.s32.totalorder %s15, 1
      %p53 = por %p51, %p52
      %p54 = scmp.ne.s32.totalorder %s46, %s49
      %p55 = scmp.eq.s32.totalorder %s15, 0
      %p56 = por %p54, %p55
      %p57 = scmp.ne.s32.totalorder %s46, %s49
      %p58 = scmp.eq.s32.totalorder %s20, 1
      %p59 = por %p57, %p58
      %p60 = scmp.ne.s32.totalorder %s49, %s50
      %p61 = scmp.eq.s32.totalorder %s20, 0
      %p62 = por %p60, %p61
      %p63 = scmp.ne.s32.totalorder %s49, %s50
      %p64 = scmp.eq.s32.totalorder %s21, 1
      %p65 = por %p63, %p64
      %p67 = scmp.ne.s32.totalorder %s50, %s66
      %p68 = scmp.eq.s32.totalorder %s21, 0
      %p69 = por %p67, %p68
      %s70 = ssub.s32 %s15, %s22
      %p71 = scmp.eq.s32.totalorder %s70, 0
      %s73 = sadd.s32 %s72, 1
      %s74 = scalar_select %p71, %s72, %s73
      %p77 = pneg %p71
      %p78 = scmp.eq.s32.totalorder %s15, 1
      %p79 = por %p77, %p78
      %p80 = scmp.ne.s32.totalorder %s72, %s75
      %p81 = scmp.eq.s32.totalorder %s15, 0
      %p82 = por %p80, %p81
      %p83 = scmp.ne.s32.totalorder %s72, %s75
      %p84 = scmp.eq.s32.totalorder %s20, 1
      %p85 = por %p83, %p84
      %p86 = scmp.ne.s32.totalorder %s75, %s76
      %p87 = scmp.eq.s32.totalorder %s20, 0
      %p88 = por %p86, %p87
      %p89 = scmp.ne.s32.totalorder %s75, %s76
      %p90 = scmp.eq.s32.totalorder %s21, 1
      %p91 = por %p89, %p90
      %p93 = scmp.ne.s32.totalorder %s76, %s92
      %p94 = scmp.eq.s32.totalorder %s21, 0
      %p95 = por %p93, %p94
      %p96 = scmp.le.s32.totalorder 1, %s15
      %p97 = scmp.lt.s32.totalorder %s15, 3
      %p98 = pnand %p96, %p97
      %p99 = pneg %p98
      // Predicated region
      $region9: #{tpu_custom_call.1} parent=5 // pred_check
        _
      $region10: #{tpu_custom_call.1} parent=5 // pred_check_branch
        %101 = sbr.rel (%p98) target = $region12
      $region11: #{tpu_custom_call.1} parent=5 // pred_region
        %s102 = ssub.s32 %s15, 1
        // Predicated region
        $region13: #{tpu_custom_call.1} parent=11 // pred_check
          %p103 = pneg %p36
        $region14: #{tpu_custom_call.1} parent=11 // pred_check_branch
          %105 = sbr.rel (%p103) target = $region16
        $region15: #{tpu_custom_call.1} parent=11 // pred_region
          _
        $region16: #{tpu_custom_call.1} parent=11 // pred_fallthru
          _
      $region12: #{tpu_custom_call.1} parent=5 // pred_fallthru
        _
      %p106 = scmp.lt.s32.totalorder %s15, 2
      // Predicated region
      $region17: #{tpu_custom_call.1} parent=5 // pred_check
        %p107 = pneg %p106
      $region18: #{tpu_custom_call.1} parent=5 // pred_check_branch
        %109 = sbr.rel (%p107) target = $region20
      $region19: #{tpu_custom_call.1} parent=5 // pred_region
        // Predicated region
        $region21: #{tpu_custom_call.1} parent=19 // pred_check
          %p110 = pneg %p56
        $region22: #{tpu_custom_call.1} parent=19 // pred_check_branch
          %112 = sbr.rel (%p110) target = $region24
        $region23: #{tpu_custom_call.1} parent=19 // pred_region
          %s113 = sand.u32 %s46, 1
          %s114 = scalar_lea.sflag [#allocation4], %s113
          %s115 = sand.u32 %s46, 1
          %s116 = smul.addr %s115, 8
          %s117 = scalar_lea.vmem [#allocation3], %s116
          %119 = vsyncadd %s114, 0
          %s120 = smul.addr %s15, 8
          %s121 = scalar_lea.hbm %s1, %s120
          %s123 = sshll.u32 %s121, 4
          %s124 = int_to_ptr.hbm [resolvable:$true] %s123
          %s125 = sshll.u32 %s117, 4
          %s126 = int_to_ptr.vmem [resolvable:$true] %s125
          %128 = dma.hbm_to_vmem [thread:$0]  %s124, 128, %s126, %s114
        $region24: #{tpu_custom_call.1} parent=19 // pred_fallthru
          _
      $region20: #{tpu_custom_call.1} parent=5 // pred_fallthru
        _
      %p129 = scmp.le.s32.totalorder 1, %s15
      %p130 = scmp.lt.s32.totalorder %s15, 3
      %p131 = pnand %p129, %p130
      %p132 = pneg %p131
      // Predicated region
      $region25: #{tpu_custom_call.1} parent=5 // pred_check
        _
      $region26: #{tpu_custom_call.1} parent=5 // pred_check_branch
        %134 = sbr.rel (%p131) target = $region28
      $region27: #{tpu_custom_call.1} parent=5 // pred_region
        %s135 = ssub.s32 %s15, 1
        %s136 = sand.u32 %s49, 1
        %s137 = scalar_lea.sflag [#allocation4], %s136
        %s138 = sand.u32 %s49, 1
        %s139 = smul.addr %s138, 8
        %s140 = scalar_lea.vmem [#allocation3], %s139
        // Predicated region
        $region29: #{tpu_custom_call.1} parent=27 // pred_check
          %p141 = pneg %p62
        $region30: #{tpu_custom_call.1} parent=27 // pred_check_branch
          %143 = sbr.rel (%p141) target = $region32
        $region31: #{tpu_custom_call.1} parent=27 // pred_region
          %145 = dma.done %s137, 128
        $region32: #{tpu_custom_call.1} parent=27 // pred_fallthru
          _
        %p146 = pneg %p36
        %p147 = pneg %p33
        %s148 = sand.u32 %s49, 1
        %s149 = scalar_lea.sflag [#allocation4], %s148
        %s150 = sand.u32 %s49, 1
        %s151 = smul.addr %s150, 8
        %s152 = scalar_lea.vmem [#allocation3], %s151
        %p153 = pneg %p62
        %p154 = pneg %p59
        %p155 = pneg %p88
        %p156 = pneg %p85
        %s157 = sand.u32 %s75, 1
        %s158 = scalar_lea.sflag [#allocation5], %s157
        %s159 = sand.u32 %s75, 1
        %s160 = smul.addr %s159, 8
        %s161 = scalar_lea.vmem [#allocation6], %s160
        %v162 = vld [vmem:[%s140] sm:$0xff]
        %s163 = sld [smem:[#allocation2]]
        %v164 = vstv %s163
        %v165 = vmul.f32 %v162, %v164
        %166 = vst [vmem:[%s161] sm:$0xff] %v165
        %s167 = sand.u32 %s75, 1
        %s168 = scalar_lea.sflag [#allocation5], %s167
        %s169 = sand.u32 %s75, 1
        %s170 = smul.addr %s169, 8
        %s171 = scalar_lea.vmem [#allocation6], %s170
        // Predicated region
        $region33: #{tpu_custom_call.1} parent=27 // pred_check
          %p172 = pneg %p85
        $region34: #{tpu_custom_call.1} parent=27 // pred_check_branch
          %174 = sbr.rel (%p172) target = $region36
        $region35: #{tpu_custom_call.1} parent=27 // pred_region
          %176 = vsyncadd %s168, 0
          %s177 = smul.addr %s20, 8
          %s178 = scalar_lea.hbm %s2, %s177
          %s180 = sshll.u32 %s171, 4
          %s181 = int_to_ptr.vmem [resolvable:$true] %s180
          %s182 = sshll.u32 %s178, 4
          %s183 = int_to_ptr.hbm [resolvable:$true] %s182
          %185 = dma.vmem_to_hbm [thread:$0]  %s181, 128, %s183, %s168
        $region36: #{tpu_custom_call.1} parent=27 // pred_fallthru
          _
      $region28: #{tpu_custom_call.1} parent=5 // pred_fallthru
        _
      %p186 = scmp.le.s32.totalorder 2, %s15
      // Predicated region
      $region37: #{tpu_custom_call.1} parent=5 // pred_check
        %p187 = pneg %p186
      $region38: #{tpu_custom_call.1} parent=5 // pred_check_branch
        %189 = sbr.rel (%p187) target = $region40
      $region39: #{tpu_custom_call.1} parent=5 // pred_region
        %s190 = ssub.s32 %s15, 2
        // Predicated region
        $region41: #{tpu_custom_call.1} parent=39 // pred_check
          %p191 = pneg %p91
        $region42: #{tpu_custom_call.1} parent=39 // pred_check_branch
          %193 = sbr.rel (%p191) target = $region44
        $region43: #{tpu_custom_call.1} parent=39 // pred_region
          %s194 = sand.u32 %s76, 1
          %s195 = scalar_lea.sflag [#allocation5], %s194
          %s196 = sand.u32 %s76, 1
          %s197 = smul.addr %s196, 8
          %s198 = scalar_lea.vmem [#allocation6], %s197
          %200 = dma.done %s195, 128
        $region44: #{tpu_custom_call.1} parent=39 // pred_fallthru
          _
      $region40: #{tpu_custom_call.1} parent=5 // pred_fallthru
        _
    $region6: #{tpu_custom_call.1} parent=1 // loop_footer
      %s19 = sadd.s32 1, %s15
    $region7: #{tpu_custom_call.1} parent=1 // loop_footer_branch
      %14 = sbr.rel target = $region3
    $region8: #{tpu_custom_call.1} parent=1 // loop_exit
      _
    %201 = vsyncpa [#allocation4], 1
    %s202 = scalar_lea.sflag [#allocation4], 1
    %203 = vsyncpa %s202, 1
    %204 = vsyncpa [#allocation5], 1
    %s205 = scalar_lea.sflag [#allocation5], 1
    %206 = vsyncpa %s205, 1

</llo_original>
